<compile_context>
chip_gen: v6e
topology: v6e:2x2x1
jax: 0.10.0
libtpu: 0.0.40
codegen_flags: <defaults>
</compile_context>

<pallas_src>
import functools

import jax
import jax.numpy as jnp
from jax import lax
from jax.experimental import pallas as pl
from jax.experimental.pallas import tpu as pltpu


# ----------------------------------------------------------------------------
# Fused kernel
# ----------------------------------------------------------------------------
def _mbconv_kernel(x_ref, *refs, W, Wo, pad, stride, th_out, th_in, ht,
                   hidden, oup, has_expand, use_res, L):
    f32 = jnp.float32
    i = 0
    if has_expand:
        mval_ref, w_exp_ref, b_exp_ref = refs[0], refs[1], refs[2]
        i = 3
    w_dw_ref, b_dw_ref = refs[i], refs[i + 1]
    w_proj_ref, b_proj_ref = refs[i + 2], refs[i + 3]
    i += 4
    if stride == 1:
        ml_ref, mr_ref = refs[i], refs[i + 1]
        i += 2
    o_ref = refs[i]

    M = th_out * Wo

    # ---- this tile's flattened input rows: channels on sublanes, flat spatial on
    #      lanes.  With ht == 1 everything below is a static slice.
    if ht == 1:
        xs = x_ref[:, :L].astype(f32)                                 # (cin, L)
    else:
        start = pl.program_id(1) * (th_out * stride * W)
        xs = x_ref[:, pl.ds(start, L)].astype(f32)

    # ---- 1x1 expansion + BN + ReLU6 on the MXU (K = cin), then zero the H-pad rows
    #      so the depthwise sees true zero padding of the *expanded* activation.
    if has_expand:
        if ht == 1:
            mval = mval_ref[:, :L]
        else:
            mval = mval_ref[:, pl.ds(pl.program_id(1) * (th_out * stride * W), L)]
        mm = lax.dot_general(w_exp_ref[...].astype(f32), xs,
                             (((1,), (0,)), ((), ())),
                             preferred_element_type=f32)              # (hidden, L)
        h = jnp.clip(mm + b_exp_ref[...].astype(f32), 0.0, 6.0) * mval
    else:
        h = xs                                                        # hidden == cin

    wd = w_dw_ref[...].astype(f32)                                    # (hidden, 9)
    b_dw = b_dw_ref[...].astype(f32)                                  # (hidden, 1)

    if stride == 1:
        # ---- 3x3 depthwise: each (kh,kw) tap is a static lane shift of the flat
        #      activation; left/right image-edge taps are zeroed by column masks.
        def tap(kh, kw):
            off = (kh * W + kw) * pad
            return h[:, off:off + M]

        acc_l = jnp.zeros((hidden, M), f32)
        acc_c = jnp.zeros((hidden, M), f32)
        acc_r = jnp.zeros((hidden, M), f32)
        for kh in range(3):
            acc_l = acc_l + tap(kh, 0) * wd[:, 3 * kh + 0:3 * kh + 1]
            acc_c = acc_c + tap(kh, 1) * wd[:, 3 * kh + 1:3 * kh + 2]
            acc_r = acc_r + tap(kh, 2) * wd[:, 3 * kh + 2:3 * kh + 3]
        pre = acc_c + acc_l * ml_ref[...] + acc_r * mr_ref[...] + b_dw
        d = jnp.clip(pre, 0.0, 6.0)                                   # (hidden, M)
    else:
        # ---- strided fallback (stride 2/4, never taken by the tested config):
        #      3-D taps over a zero-column-padded slab.
        hc = h[:, pad:pad + th_in * W].reshape(hidden, th_in, W)
        zcol = jnp.zeros((hidden, th_in, pad), f32)
        hp = jnp.concatenate([zcol, hc, zcol], axis=2)                # (hidden, th_in, W+2p)
        acc = jnp.zeros((hidden, th_out, Wo), f32)
        for kh in range(3):
            rs = hp[:, kh * pad: kh * pad + (th_out - 1) * stride + 1: stride, :]
            for kw in range(3):
                tp = rs[:, :, kw * pad: kw * pad + (Wo - 1) * stride + 1: stride]
                acc = acc + tp * wd[:, 3 * kh + kw: 3 * kh + kw + 1][:, :, None]
        d = jnp.clip(acc + b_dw[:, :, None], 0.0, 6.0).reshape(hidden, M)

    # ---- 1x1 projection + BN (+ residual), channels-major so the (oup, th_out*Wo)
    #      store is lane-dense and lands directly in NCHW order.
    y = lax.dot_general(w_proj_ref[...].astype(f32), d,
                        (((1,), (0,)), ((), ())),
                        preferred_element_type=f32)                   # (oup, M)
    if use_res:
        # Input slab is already channels-major -> residual is a plain lane-shifted add.
        res_off = pad * (W + 1)
        y = y + xs[:, res_off:res_off + M]
    y = y + b_proj_ref[...].astype(f32)
    o_ref[...] = y.astype(o_ref.dtype)


# ----------------------------------------------------------------------------
# Device-aware tiling helpers
# ----------------------------------------------------------------------------
def _device_info():
    vmem_bytes = 64 * 1024 * 1024
    num_cores = 1
    try:
        info = pltpu.get_tpu_info()
        vmem_bytes = int(getattr(info, "vmem_capacity_bytes", vmem_bytes))
        for name in ("num_tensorcores", "tensorcore_count", "num_cores", "core_count"):
            v = getattr(info, name, None)
            if v:
                num_cores = int(v)
                break
    except Exception:
        pass
    return vmem_bytes, num_cores


def _pick_row_tile(Ho, W, Wo, FL, cin, hidden, oup, stride, pad, batch,
                   vmem_bytes, num_cores):
    """Largest divisor of Ho whose estimated live bytes fit a generation-scaled budget."""
    budget = max(1 << 20, min(vmem_bytes // 16, 8 << 20))   # ~4 MiB v7x, ~8 MiB v5e/v6e
    best = 1
    for th in range(1, Ho + 1):
        if Ho % th:
            continue
        th_in = (th - 1) * stride + 2 * pad + 1
        L = th_in * W + 2 * pad
        M = th * Wo
        live = 4 * (2 * cin * FL            # double-buffered per-image input block
                    + hidden * L            # expanded activation
                    + 4 * hidden * M        # depthwise taps + accumulators
                    + 4 * oup * M)          # projection result + residual + out buffers
        if live <= budget:
            best = th
    # Only split rows when the chip has >1 TensorCore and batch alone can't feed it.
    while num_cores > 1 and batch * (Ho // best) < num_cores and best % 2 == 0:
        best //= 2
    return best


# ----------------------------------------------------------------------------
# Wrapper
# ----------------------------------------------------------------------------
def mobilev2_residual(x_nchw, params, *, inp, oup, stride, expanse_ratio, dilation=1):
    assert stride in (1, 2, 4)
    hidden = int(inp * expanse_ratio)
    use_res = (stride == 1) and (inp == oup)
    has_expand = expanse_ratio != 1
    pad = dilation
    ke = 2 * dilation + 1

    N, C, H, W = x_nchw.shape
    assert C == inp
    Hp, Wp = H + 2 * pad, W + 2 * pad
    Ho = (Hp - ke) // stride + 1
    Wo = (Wp - ke) // stride + 1
    if stride == 1:
        assert Wo == W

    # Channels-major, H-padded, flat-spatial input with a `pad`-element apron on the
    # flat axis (so every stride==1 depthwise tap is an in-bounds lane shift).
    # No NCHW->NHWC transpose and no W-padding is materialized.
    FL = Hp * W + 2 * pad
    x_flat = jnp.pad(x_nchw, ((0, 0), (0, 0), (pad, pad), (0, 0)))
    x_flat = jnp.pad(x_flat.reshape(N, C, Hp * W), ((0, 0), (0, 0), (pad, pad)))

    vmem_bytes, num_cores = _device_info()
    th_out = _pick_row_tile(Ho, W, Wo, FL, inp, hidden, oup, stride, pad, N,
                            vmem_bytes, num_cores)
    ht = Ho // th_out
    th_in = (th_out - 1) * stride + ke
    L = th_in * W + 2 * pad
    M = th_out * Wo

    # Fold BN scale into conv weights; everything is passed channels-on-sublanes.
    consts = []
    if has_expand:
        j = jnp.arange(FL)
        p = j - pad
        row = p // W
        m_valid = (((p >= 0) & (p < Hp * W) & (row >= pad) & (row < pad + H))
                   .astype(jnp.float32).reshape(1, FL))
        w_exp_t = (params["w_exp"] * params["s_exp"][None, :]).T          # (hidden, cin)
        b_exp = params["b_exp"].reshape(hidden, 1)
        consts += [m_valid, w_exp_t, b_exp]
    w_dw_k = jnp.transpose(params["w_dw"] * params["s_dw"][None, None, :],
                           (2, 0, 1)).reshape(hidden, 9)
    b_dw = params["b_dw"].reshape(hidden, 1)
    w_proj_t = (params["w_proj"] * params["s_proj"][None, :]).T            # (oup, hidden)
    b_proj = params["b_proj"].reshape(oup, 1)
    consts += [w_dw_k, b_dw, w_proj_t, b_proj]
    if stride == 1:
        col = jnp.arange(M) % W
        mask_l = (col >= pad).astype(jnp.float32).reshape(1, M)
        mask_r = (col < W - pad).astype(jnp.float32).reshape(1, M)
        consts += [mask_l, mask_r]

    def _const_spec(a):
        nd = a.ndim
        return pl.BlockSpec(a.shape, lambda n, t, _nd=nd: (0,) * _nd)

    in_specs = ([pl.BlockSpec((None, inp, FL), lambda n, t: (n, 0, 0))]
                + [_const_spec(a) for a in consts])
    out_specs = pl.BlockSpec((None, oup, None, M), lambda n, t: (n, 0, t, 0))

    kernel = functools.partial(
        _mbconv_kernel, W=W, Wo=Wo, pad=pad, stride=stride, th_out=th_out,
        th_in=th_in, ht=ht, hidden=hidden, oup=oup,
        has_expand=has_expand, use_res=use_res, L=L)

    flops = 2 * N * ht * ((hidden * inp * L if has_expand else 0)
                          + 9 * hidden * M + oup * hidden * M)
    bytes_accessed = 4 * (int(x_flat.size) + N * oup * Ho * Wo
                          + sum(int(a.size) for a in consts))

    out = pl.pallas_call(
        kernel,
        out_shape=jax.ShapeDtypeStruct((N, oup, ht, M), x_nchw.dtype),
        grid=(N, ht),
        in_specs=in_specs,
        out_specs=out_specs,
        compiler_params=pltpu.CompilerParams(
            dimension_semantics=("parallel", "parallel"),
            vmem_limit_bytes=min(vmem_bytes // 2, 64 * 1024 * 1024)),
        cost_estimate=pl.CostEstimate(flops=flops, transcendentals=0,
                                      bytes_accessed=bytes_accessed),
    )(x_flat, *consts)

    # Row tiles stitch back with a contiguous reshape only (no transpose, no slice).
    return out.reshape(N, oup, Ho, Wo)


# ----------------------------------------------------------------------------
# Parameters (eval-mode BN folded to per-channel scale/bias) + pure-JAX reference
# ----------------------------------------------------------------------------
def _fold_bn(gamma, beta, mean, var, eps=1e-5):
    s = gamma / jnp.sqrt(var + eps)
    b = beta - mean * s
    return s, b


def init_params(key, inp, oup, expanse_ratio):
    hidden = int(inp * expanse_ratio)
    ks = jax.random.split(key, 8)
    p = {}

    def bn(k, c):
        k1, k2, k3, k4 = jax.random.split(k, 4)
        gamma = 1.0 + 0.1 * jax.random.normal(k1, (c,), jnp.float32)
        beta = 0.1 * jax.random.normal(k2, (c,), jnp.float32)
        mean = 0.1 * jax.random.normal(k3, (c,), jnp.float32)
        var = jnp.abs(jax.random.normal(k4, (c,), jnp.float32)) + 0.5
        return _fold_bn(gamma, beta, mean, var)

    if expanse_ratio != 1:
        p["w_exp"] = 0.2 * jax.random.normal(ks[0], (inp, hidden), jnp.float32)
        p["s_exp"], p["b_exp"] = bn(ks[1], hidden)
    p["w_dw"] = 0.2 * jax.random.normal(ks[2], (3, 3, hidden), jnp.float32)
    p["s_dw"], p["b_dw"] = bn(ks[3], hidden)
    p["w_proj"] = 0.2 * jax.random.normal(ks[4], (hidden, oup), jnp.float32)
    p["s_proj"], p["b_proj"] = bn(ks[5], oup)
    return p


def reference(x_nchw, params, *, inp, oup, stride, expanse_ratio, dilation=1):
    hidden = int(inp * expanse_ratio)
    use_res = (stride == 1) and (inp == oup)
    pad = dilation
    x = jnp.transpose(x_nchw, (0, 2, 3, 1))
    if expanse_ratio != 1:
        h = jnp.einsum("nhwc,cd->nhwd", x, params["w_exp"])
        h = h * params["s_exp"].reshape(1, 1, 1, -1) + params["b_exp"].reshape(1, 1, 1, -1)
        h = jnp.clip(h, 0.0, 6.0)
    else:
        h = x
    wdw = params["w_dw"].reshape(3, 3, 1, hidden)
    d = lax.conv_general_dilated(
        h, wdw, window_strides=(stride, stride), padding=[(pad, pad), (pad, pad)],
        rhs_dilation=(dilation, dilation), feature_group_count=hidden,
        dimension_numbers=("NHWC", "HWIO", "NHWC"))
    d = d * params["s_dw"].reshape(1, 1, 1, -1) + params["b_dw"].reshape(1, 1, 1, -1)
    d = jnp.clip(d, 0.0, 6.0)
    y = jnp.einsum("nhwc,cd->nhwd", d, params["w_proj"])
    y = y * params["s_proj"].reshape(1, 1, 1, -1) + params["b_proj"].reshape(1, 1, 1, -1)
    if use_res:
        y = y + x
    return jnp.transpose(y, (0, 3, 1, 2))


# ----------------------------------------------------------------------------
if __name__ == "__main__":
    # Config: inp=8, oup=8, stride=1, expanse_ratio=2 -> hidden=16, residual active.
    inp, oup, stride, expanse_ratio, dilation = 8, 8, 1, 2, 1

    key = jax.random.PRNGKey(0)
    kx, kp = jax.random.split(key)
    x = jax.random.normal(kx, (2, inp, 16, 16), jnp.float32)   # NCHW
    params = init_params(kp, inp, oup, expanse_ratio)

    out = mobilev2_residual(x, params, inp=inp, oup=oup, stride=stride,
                            expanse_ratio=expanse_ratio, dilation=dilation)
    out = jax.block_until_ready(out)

    ref = reference(x, params, inp=inp, oup=oup, stride=stride,
                    expanse_ratio=expanse_ratio, dilation=dilation)
    assert out.shape == ref.shape == (2, oup, 16, 16)
    err = float(jnp.max(jnp.abs(out - ref)))
    assert err < 5e-4, err
    print("KERNEL_OK")
</pallas_src>

<mosaic_0001>
module attributes {stable_mosaic.version = 11 : i64} {
  func.func @_mbconv_kernel(%arg0: i32, %arg1: i32, %arg2: memref<1x8x290xf32, #tpu.memory_space<vmem>>, %arg3: memref<1x290xf32, #tpu.memory_space<vmem>>, %arg4: memref<16x8xf32, #tpu.memory_space<vmem>>, %arg5: memref<16x1xf32, #tpu.memory_space<vmem>>, %arg6: memref<16x9xf32, #tpu.memory_space<vmem>>, %arg7: memref<16x1xf32, #tpu.memory_space<vmem>>, %arg8: memref<8x16xf32, #tpu.memory_space<vmem>>, %arg9: memref<8x1xf32, #tpu.memory_space<vmem>>, %arg10: memref<1x256xf32, #tpu.memory_space<vmem>>, %arg11: memref<1x256xf32, #tpu.memory_space<vmem>>, %arg12: memref<1x8x1x256xf32, #tpu.memory_space<vmem>>) attributes {dimension_semantics = [#tpu.dimension_semantics<parallel>, #tpu.dimension_semantics<parallel>], iteration_bounds = array<i64: 2, 1>, scalar_prefetch = 0 : i64, scratch_operands = 0 : i64, tpu.core_type = #tpu.core_type<tc>, window_params = [{transform_indices = @transform_0, window_bounds = array<i64: 1, 8, 290>}, {pipeline_mode = #tpu.pipeline_mode<synchronous>, transform_indices = @transform_1, window_bounds = array<i64: 1, 290>}, {pipeline_mode = #tpu.pipeline_mode<synchronous>, transform_indices = @transform_2, window_bounds = array<i64: 16, 8>}, {pipeline_mode = #tpu.pipeline_mode<synchronous>, transform_indices = @transform_3, window_bounds = array<i64: 16, 1>}, {pipeline_mode = #tpu.pipeline_mode<synchronous>, transform_indices = @transform_4, window_bounds = array<i64: 16, 9>}, {pipeline_mode = #tpu.pipeline_mode<synchronous>, transform_indices = @transform_5, window_bounds = array<i64: 16, 1>}, {pipeline_mode = #tpu.pipeline_mode<synchronous>, transform_indices = @transform_6, window_bounds = array<i64: 8, 16>}, {pipeline_mode = #tpu.pipeline_mode<synchronous>, transform_indices = @transform_7, window_bounds = array<i64: 8, 1>}, {pipeline_mode = #tpu.pipeline_mode<synchronous>, transform_indices = @transform_8, window_bounds = array<i64: 1, 256>}, {pipeline_mode = #tpu.pipeline_mode<synchronous>, transform_indices = @transform_9, window_bounds = array<i64: 1, 256>}, {transform_indices = @transform_10, window_bounds = array<i64: 1, 8, 1, 256>}]} {
    %c0 = arith.constant 0 : index
    %c0_0 = arith.constant 0 : index
    %c0_1 = arith.constant 0 : index
    %0 = vector.load %arg2[%c0, %c0_0, %c0_1] : memref<1x8x290xf32, #tpu.memory_space<vmem>>, vector<1x8x290xf32>
    %1 = vector.shape_cast %0 : vector<1x8x290xf32> to vector<8x290xf32>
    %c0_2 = arith.constant 0 : index
    %c0_3 = arith.constant 0 : index
    %2 = vector.load %arg3[%c0_2, %c0_3] : memref<1x290xf32, #tpu.memory_space<vmem>>, vector<1x290xf32>
    %c0_4 = arith.constant 0 : index
    %c0_5 = arith.constant 0 : index
    %3 = vector.load %arg4[%c0_4, %c0_5] : memref<16x8xf32, #tpu.memory_space<vmem>>, vector<16x8xf32>
    %cst = arith.constant dense<0.000000e+00> : vector<16x290xf32>
    %4 = tpu.matmul %3, %1, %cst {dimension_numbers = #tpu.dot_dimension_numbers<[1], [0], [0], [1], [0, 0, 1, 1], [], []>} : vector<16x8xf32>, vector<8x290xf32>, vector<16x290xf32> -> vector<16x290xf32>
    %c0_6 = arith.constant 0 : index
    %c0_7 = arith.constant 0 : index
    %5 = vector.load %arg5[%c0_6, %c0_7] : memref<16x1xf32, #tpu.memory_space<vmem>>, vector<16x1xf32>
    %6 = vector.broadcast %5 : vector<16x1xf32> to vector<16x290xf32>
    %7 = arith.addf %4, %6 : vector<16x290xf32>
    %cst_8 = arith.constant 0.000000e+00 : f32
    %cst_9 = arith.constant 6.000000e+00 : f32
    %8 = vector.broadcast %cst_8 : f32 to vector<16x290xf32>
    %9 = arith.maximumf %8, %7 : vector<16x290xf32>
    %10 = vector.broadcast %cst_9 : f32 to vector<16x290xf32>
    %11 = arith.minimumf %10, %9 : vector<16x290xf32>
    %12 = vector.broadcast %2 : vector<1x290xf32> to vector<16x290xf32>
    %13 = arith.mulf %11, %12 : vector<16x290xf32>
    %c0_10 = arith.constant 0 : index
    %c0_11 = arith.constant 0 : index
    %14 = vector.load %arg6[%c0_10, %c0_11] : memref<16x9xf32, #tpu.memory_space<vmem>>, vector<16x9xf32>
    %c0_12 = arith.constant 0 : index
    %c0_13 = arith.constant 0 : index
    %15 = vector.load %arg7[%c0_12, %c0_13] : memref<16x1xf32, #tpu.memory_space<vmem>>, vector<16x1xf32>
    %cst_14 = arith.constant 0.000000e+00 : f32
    %16 = vector.broadcast %cst_14 : f32 to vector<16x256xf32>
    %cst_15 = arith.constant 0.000000e+00 : f32
    %17 = vector.broadcast %cst_15 : f32 to vector<16x256xf32>
    %cst_16 = arith.constant 0.000000e+00 : f32
    %18 = vector.broadcast %cst_16 : f32 to vector<16x256xf32>
    %19 = vector.extract_strided_slice %13 {offsets = [0, 0], sizes = [16, 256], strides = [1, 1]} : vector<16x290xf32> to vector<16x256xf32>
    %20 = vector.extract_strided_slice %14 {offsets = [0, 0], sizes = [16, 1], strides = [1, 1]} : vector<16x9xf32> to vector<16x1xf32>
    %21 = vector.broadcast %20 : vector<16x1xf32> to vector<16x256xf32>
    %22 = arith.mulf %19, %21 : vector<16x256xf32>
    %23 = arith.addf %16, %22 : vector<16x256xf32>
    %24 = vector.extract_strided_slice %13 {offsets = [0, 1], sizes = [16, 256], strides = [1, 1]} : vector<16x290xf32> to vector<16x256xf32>
    %25 = vector.extract_strided_slice %14 {offsets = [0, 1], sizes = [16, 1], strides = [1, 1]} : vector<16x9xf32> to vector<16x1xf32>
    %26 = vector.broadcast %25 : vector<16x1xf32> to vector<16x256xf32>
    %27 = arith.mulf %24, %26 : vector<16x256xf32>
    %28 = arith.addf %17, %27 : vector<16x256xf32>
    %29 = vector.extract_strided_slice %13 {offsets = [0, 2], sizes = [16, 256], strides = [1, 1]} : vector<16x290xf32> to vector<16x256xf32>
    %30 = vector.extract_strided_slice %14 {offsets = [0, 2], sizes = [16, 1], strides = [1, 1]} : vector<16x9xf32> to vector<16x1xf32>
    %31 = vector.broadcast %30 : vector<16x1xf32> to vector<16x256xf32>
    %32 = arith.mulf %29, %31 : vector<16x256xf32>
    %33 = arith.addf %18, %32 : vector<16x256xf32>
    %34 = vector.extract_strided_slice %13 {offsets = [0, 16], sizes = [16, 256], strides = [1, 1]} : vector<16x290xf32> to vector<16x256xf32>
    %35 = vector.extract_strided_slice %14 {offsets = [0, 3], sizes = [16, 1], strides = [1, 1]} : vector<16x9xf32> to vector<16x1xf32>
    %36 = vector.broadcast %35 : vector<16x1xf32> to vector<16x256xf32>
    %37 = arith.mulf %34, %36 : vector<16x256xf32>
    %38 = arith.addf %23, %37 : vector<16x256xf32>
    %39 = vector.extract_strided_slice %13 {offsets = [0, 17], sizes = [16, 256], strides = [1, 1]} : vector<16x290xf32> to vector<16x256xf32>
    %40 = vector.extract_strided_slice %14 {offsets = [0, 4], sizes = [16, 1], strides = [1, 1]} : vector<16x9xf32> to vector<16x1xf32>
    %41 = vector.broadcast %40 : vector<16x1xf32> to vector<16x256xf32>
    %42 = arith.mulf %39, %41 : vector<16x256xf32>
    %43 = arith.addf %28, %42 : vector<16x256xf32>
    %44 = vector.extract_strided_slice %13 {offsets = [0, 18], sizes = [16, 256], strides = [1, 1]} : vector<16x290xf32> to vector<16x256xf32>
    %45 = vector.extract_strided_slice %14 {offsets = [0, 5], sizes = [16, 1], strides = [1, 1]} : vector<16x9xf32> to vector<16x1xf32>
    %46 = vector.broadcast %45 : vector<16x1xf32> to vector<16x256xf32>
    %47 = arith.mulf %44, %46 : vector<16x256xf32>
    %48 = arith.addf %33, %47 : vector<16x256xf32>
    %49 = vector.extract_strided_slice %13 {offsets = [0, 32], sizes = [16, 256], strides = [1, 1]} : vector<16x290xf32> to vector<16x256xf32>
    %50 = vector.extract_strided_slice %14 {offsets = [0, 6], sizes = [16, 1], strides = [1, 1]} : vector<16x9xf32> to vector<16x1xf32>
    %51 = vector.broadcast %50 : vector<16x1xf32> to vector<16x256xf32>
    %52 = arith.mulf %49, %51 : vector<16x256xf32>
    %53 = arith.addf %38, %52 : vector<16x256xf32>
    %54 = vector.extract_strided_slice %13 {offsets = [0, 33], sizes = [16, 256], strides = [1, 1]} : vector<16x290xf32> to vector<16x256xf32>
    %55 = vector.extract_strided_slice %14 {offsets = [0, 7], sizes = [16, 1], strides = [1, 1]} : vector<16x9xf32> to vector<16x1xf32>
    %56 = vector.broadcast %55 : vector<16x1xf32> to vector<16x256xf32>
    %57 = arith.mulf %54, %56 : vector<16x256xf32>
    %58 = arith.addf %43, %57 : vector<16x256xf32>
    %59 = vector.extract_strided_slice %13 {offsets = [0, 34], sizes = [16, 256], strides = [1, 1]} : vector<16x290xf32> to vector<16x256xf32>
    %60 = vector.extract_strided_slice %14 {offsets = [0, 8], sizes = [16, 1], strides = [1, 1]} : vector<16x9xf32> to vector<16x1xf32>
    %61 = vector.broadcast %60 : vector<16x1xf32> to vector<16x256xf32>
    %62 = arith.mulf %59, %61 : vector<16x256xf32>
    %63 = arith.addf %48, %62 : vector<16x256xf32>
    %c0_17 = arith.constant 0 : index
    %c0_18 = arith.constant 0 : index
    %64 = vector.load %arg10[%c0_17, %c0_18] : memref<1x256xf32, #tpu.memory_space<vmem>>, vector<1x256xf32>
    %65 = vector.broadcast %64 : vector<1x256xf32> to vector<16x256xf32>
    %66 = arith.mulf %53, %65 : vector<16x256xf32>
    %67 = arith.addf %58, %66 : vector<16x256xf32>
    %c0_19 = arith.constant 0 : index
    %c0_20 = arith.constant 0 : index
    %68 = vector.load %arg11[%c0_19, %c0_20] : memref<1x256xf32, #tpu.memory_space<vmem>>, vector<1x256xf32>
    %69 = vector.broadcast %68 : vector<1x256xf32> to vector<16x256xf32>
    %70 = arith.mulf %63, %69 : vector<16x256xf32>
    %71 = arith.addf %67, %70 : vector<16x256xf32>
    %72 = vector.broadcast %15 : vector<16x1xf32> to vector<16x256xf32>
    %73 = arith.addf %71, %72 : vector<16x256xf32>
    %cst_21 = arith.constant 0.000000e+00 : f32
    %cst_22 = arith.constant 6.000000e+00 : f32
    %74 = vector.broadcast %cst_21 : f32 to vector<16x256xf32>
    %75 = arith.maximumf %74, %73 : vector<16x256xf32>
    %76 = vector.broadcast %cst_22 : f32 to vector<16x256xf32>
    %77 = arith.minimumf %76, %75 : vector<16x256xf32>
    %c0_23 = arith.constant 0 : index
    %c0_24 = arith.constant 0 : index
    %78 = vector.load %arg8[%c0_23, %c0_24] : memref<8x16xf32, #tpu.memory_space<vmem>>, vector<8x16xf32>
    %cst_25 = arith.constant dense<0.000000e+00> : vector<8x256xf32>
    %79 = tpu.matmul %78, %77, %cst_25 {dimension_numbers = #tpu.dot_dimension_numbers<[1], [0], [0], [1], [0, 0, 1, 1], [], []>} : vector<8x16xf32>, vector<16x256xf32>, vector<8x256xf32> -> vector<8x256xf32>
    %80 = vector.extract_strided_slice %1 {offsets = [0, 17], sizes = [8, 256], strides = [1, 1]} : vector<8x290xf32> to vector<8x256xf32>
    %81 = arith.addf %79, %80 : vector<8x256xf32>
    %c0_26 = arith.constant 0 : index
    %c0_27 = arith.constant 0 : index
    %82 = vector.load %arg9[%c0_26, %c0_27] : memref<8x1xf32, #tpu.memory_space<vmem>>, vector<8x1xf32>
    %83 = vector.broadcast %82 : vector<8x1xf32> to vector<8x256xf32>
    %84 = arith.addf %81, %83 : vector<8x256xf32>
    %c0_28 = arith.constant 0 : index
    %c0_29 = arith.constant 0 : index
    %c0_30 = arith.constant 0 : index
    %c0_31 = arith.constant 0 : index
    %85 = vector.load %arg12[%c0_28, %c0_29, %c0_30, %c0_31] : memref<1x8x1x256xf32, #tpu.memory_space<vmem>>, vector<1x8x1x256xf32>
    %86 = vector.shape_cast %85 : vector<1x8x1x256xf32> to vector<8x256xf32>
    %87 = vector.shape_cast %84 : vector<8x256xf32> to vector<1x8x1x256xf32>
    tpu.vector_store %arg12[%c0_28, %c0_29, %c0_30, %c0_31], %87 {strides = array<i32>} : memref<1x8x1x256xf32, #tpu.memory_space<vmem>>, vector<1x8x1x256xf32>,
    return
  }
  func.func @transform_0(%arg0: i32, %arg1: i32) -> (i32, i32, i32) {
    %c0_i32 = arith.constant 0 : i32
    %c0_i32_0 = arith.constant 0 : i32
    %c0_i32_1 = arith.constant 0 : i32
    return %arg0, %c0_i32, %c0_i32_0 : i32, i32, i32
  }
  func.func @transform_1(%arg0: i32, %arg1: i32) -> (i32, i32) {
    %c0_i32 = arith.constant 0 : i32
    %c0_i32_0 = arith.constant 0 : i32
    %c0_i32_1 = arith.constant 0 : i32
    return %c0_i32, %c0_i32_0 : i32, i32
  }
  func.func @transform_2(%arg0: i32, %arg1: i32) -> (i32, i32) {
    %c0_i32 = arith.constant 0 : i32
    %c0_i32_0 = arith.constant 0 : i32
    %c0_i32_1 = arith.constant 0 : i32
    return %c0_i32, %c0_i32_0 : i32, i32
  }
  func.func @transform_3(%arg0: i32, %arg1: i32) -> (i32, i32) {
    %c0_i32 = arith.constant 0 : i32
    %c0_i32_0 = arith.constant 0 : i32
    %c0_i32_1 = arith.constant 0 : i32
    return %c0_i32, %c0_i32_0 : i32, i32
  }
  func.func @transform_4(%arg0: i32, %arg1: i32) -> (i32, i32) {
    %c0_i32 = arith.constant 0 : i32
    %c0_i32_0 = arith.constant 0 : i32
    %c0_i32_1 = arith.constant 0 : i32
    return %c0_i32, %c0_i32_0 : i32, i32
  }
  func.func @transform_5(%arg0: i32, %arg1: i32) -> (i32, i32) {
    %c0_i32 = arith.constant 0 : i32
    %c0_i32_0 = arith.constant 0 : i32
    %c0_i32_1 = arith.constant 0 : i32
    return %c0_i32, %c0_i32_0 : i32, i32
  }
  func.func @transform_6(%arg0: i32, %arg1: i32) -> (i32, i32) {
    %c0_i32 = arith.constant 0 : i32
    %c0_i32_0 = arith.constant 0 : i32
    %c0_i32_1 = arith.constant 0 : i32
    return %c0_i32, %c0_i32_0 : i32, i32
  }
  func.func @transform_7(%arg0: i32, %arg1: i32) -> (i32, i32) {
    %c0_i32 = arith.constant 0 : i32
    %c0_i32_0 = arith.constant 0 : i32
    %c0_i32_1 = arith.constant 0 : i32
    return %c0_i32, %c0_i32_0 : i32, i32
  }
  func.func @transform_8(%arg0: i32, %arg1: i32) -> (i32, i32) {
    %c0_i32 = arith.constant 0 : i32
    %c0_i32_0 = arith.constant 0 : i32
    %c0_i32_1 = arith.constant 0 : i32
    return %c0_i32, %c0_i32_0 : i32, i32
  }
  func.func @transform_9(%arg0: i32, %arg1: i32) -> (i32, i32) {
    %c0_i32 = arith.constant 0 : i32
    %c0_i32_0 = arith.constant 0 : i32
    %c0_i32_1 = arith.constant 0 : i32
    return %c0_i32, %c0_i32_0 : i32, i32
  }
  func.func @transform_10(%arg0: i32, %arg1: i32) -> (i32, i32, i32, i32) {
    %c0_i32 = arith.constant 0 : i32
    %c0_i32_0 = arith.constant 0 : i32
    %c0_i32_1 = arith.constant 0 : i32
    return %arg0, %c0_i32, %arg1, %c0_i32_0 : i32, i32, i32, i32
  }
}

</mosaic_0001>

<llo_original>
// kernel: tpu_custom_call.1
$region0: #{tpu_custom_call.1}
  #allocation0 [shape = 'u32[]', space=smem, size = 0x4, offset = 0x4, fixed_abs, tag = 'smem constant byte address 0x4 - core index']
  #allocation1 [shape = 'u32[144,128]{1,0:T(1,128)}', space=vmem, size = 0x12000, scoped, tag = 'internal scratch']
  %s0 = inlined_call_operand.vmem [shape: f32[2,8,290], index: 0, kind: input, shape index: {}]
  %s1 = inlined_call_operand.hbm [shape: f32[1,290], index: 1, kind: input, shape index: {}]
  %s2 = inlined_call_operand.vmem [shape: f32[16,8], index: 2, kind: input, shape index: {}]
  %s3 = inlined_call_operand.vmem [shape: f32[16,1], index: 3, kind: input, shape index: {}]
  %s4 = inlined_call_operand.vmem [shape: f32[16,9], index: 4, kind: input, shape index: {}]
  %s5 = inlined_call_operand.vmem [shape: f32[16,1], index: 5, kind: input, shape index: {}]
  %s6 = inlined_call_operand.vmem [shape: f32[8,16], index: 6, kind: input, shape index: {}]
  %s7 = inlined_call_operand.vmem [shape: f32[8,1], index: 7, kind: input, shape index: {}]
  %s8 = inlined_call_operand.vmem [shape: f32[1,256], index: 8, kind: input, shape index: {}]
  %s9 = inlined_call_operand.vmem [shape: f32[1,256], index: 9, kind: input, shape index: {}]
  %s10 = inlined_call_operand.hbm [shape: f32[2,8,1,256], index: 10, kind: output, shape index: {}]
  %s11 = sld [smem:[#allocation0]]
  $region77: #{tpu_custom_call.1} parent=0
    _
  %s13 = ssub.s32 1, %s11
  %s14 = scalar_select 0, %s13, %s11
  $region1: #{tpu_custom_call.1} parent=0
    #allocation2 [shape = 'u8[1536]{0}', space=vmem, size = 0x800, scoped, tag = 'input window, operand 1, single buffered']
    #allocation3 [shape = 's32[2]{0}', space=sflag, size = 0x8, scoped, tag = 'scoped memory for tpu_custom_call.1']
    #allocation4 [shape = 's32[2]{0}', space=sflag, size = 0x8, scoped, tag = 'scoped memory for tpu_custom_call.1']
    #allocation5 [shape = 'u8[16384]{0}', space=vmem, size = 0x4000, scoped, tag = 'output window, operand 0']
    %15 = vsyncpa [#allocation3], 0
    %16 = vsyncpa [#allocation4], 0
    %s17 = scalar_lea.sflag [#allocation4], 1
    %18 = vsyncpa %s17, 0
    loop: start=0, step=1, limit=4
    $region2: #{tpu_custom_call.1} parent=1 // loop_pre_header
      _
    $region3: #{tpu_custom_call.1} parent=1 // loop_header
      %s20 = sphi 0, %s24
      %p21 = scmp.ge.s32.totalorder %s20, 4
      %s27 = sphi 0, %s39
      %s28 = sphi 0, %s35
      %s29 = sphi 0, %s27
      %s30 = sphi 0, %s28
      %s31 = sphi 0, %s29
      %s32 = sphi 0, %s30
      %s42 = sphi 0, %s44
      %s45 = sphi 0, %s42
      %s46 = sphi 0, %s45
      %s62 = sphi 0, %s46
      %s66 = sphi 0, %s66
      %s68 = sphi 0, %s66
      %s69 = sphi 0, %s68
      %s83 = sphi 0, %s69
      %s87 = sphi 0, %s87
      %s89 = sphi 0, %s87
      %s90 = sphi 0, %s89
      %s104 = sphi 0, %s90
      %s108 = sphi 0, %s108
      %s110 = sphi 0, %s108
      %s111 = sphi 0, %s110
      %s125 = sphi 0, %s111
      %s129 = sphi 0, %s129
      %s131 = sphi 0, %s129
      %s132 = sphi 0, %s131
      %s146 = sphi 0, %s132
      %s150 = sphi 0, %s150
      %s152 = sphi 0, %s150
      %s153 = sphi 0, %s152
      %s167 = sphi 0, %s153
      %s171 = sphi 0, %s171
      %s173 = sphi 0, %s171
      %s174 = sphi 0, %s173
      %s188 = sphi 0, %s174
      %s192 = sphi 0, %s192
      %s194 = sphi 0, %s192
      %s195 = sphi 0, %s194
      %s209 = sphi 0, %s195
      %s213 = sphi 0, %s213
      %s215 = sphi 0, %s213
      %s216 = sphi 0, %s215
      %s230 = sphi 0, %s216
      %s234 = sphi 0, %s234
      %s236 = sphi 0, %s234
      %s237 = sphi 0, %s236
      %s251 = sphi 0, %s237
      %s259 = sphi 0, %s261
      %s262 = sphi 0, %s259
      %s263 = sphi 0, %s262
      %s279 = sphi 0, %s263
    $region4: #{tpu_custom_call.1} parent=1 // loop_header_branch
      %23 = sbr.rel (%p21) target = $region8
    $region5: #{tpu_custom_call.1} parent=1 // loop_body
      %s25 = ssub.s32 %s20, 1
      %s26 = ssub.s32 %s20, 2
      %s33 = sadd.s32 1, %s28
      %p34 = scmp.ge.s32.totalorder %s33, 1
      %s35 = scalar_select %p34, 0, %s33
      %s36 = sadd.s32 1, %s27
      %s37 = scalar_select %p34, %s36, %s27
      %p38 = scmp.ge.s32.totalorder %s37, 2
      %s39 = scalar_select %p38, 0, %s37
      %s40 = ssub.s32 %s27, %s39
      %p41 = scmp.eq.s32.totalorder %s40, 0
      %s43 = sadd.s32 %s42, 1
      %s44 = scalar_select %p41, %s42, %s43
      %p47 = pneg %p41
      %p48 = scmp.eq.s32.totalorder %s20, 1
      %p49 = por %p47, %p48
      %p50 = scmp.ne.s32.totalorder %s42, %s45
      %p51 = scmp.eq.s32.totalorder %s20, 0
      %p52 = por %p50, %p51
      %p53 = scmp.ne.s32.totalorder %s42, %s45
      %p54 = scmp.eq.s32.totalorder %s25, 1
      %p55 = por %p53, %p54
      %p56 = scmp.ne.s32.totalorder %s45, %s46
      %p57 = scmp.eq.s32.totalorder %s25, 0
      %p58 = por %p56, %p57
      %p59 = scmp.ne.s32.totalorder %s45, %s46
      %p60 = scmp.eq.s32.totalorder %s26, 1
      %p61 = por %p59, %p60
      %p63 = scmp.ne.s32.totalorder %s46, %s62
      %p64 = scmp.eq.s32.totalorder %s26, 0
      %p65 = por %p63, %p64
      %s67 = sadd.s32 %s66, 1
      %p70 = scmp.eq.s32.totalorder %s20, 1
      %p71 = scmp.ne.s32.totalorder %s66, %s68
      %p72 = scmp.eq.s32.totalorder %s20, 0
      %p73 = por %p71, %p72
      %p74 = scmp.ne.s32.totalorder %s66, %s68
      %p75 = scmp.eq.s32.totalorder %s25, 1
      %p76 = por %p74, %p75
      %p77 = scmp.ne.s32.totalorder %s68, %s69
      %p78 = scmp.eq.s32.totalorder %s25, 0
      %p79 = por %p77, %p78
      %p80 = scmp.ne.s32.totalorder %s68, %s69
      %p81 = scmp.eq.s32.totalorder %s26, 1
      %p82 = por %p80, %p81
      %p84 = scmp.ne.s32.totalorder %s69, %s83
      %p85 = scmp.eq.s32.totalorder %s26, 0
      %p86 = por %p84, %p85
      %s88 = sadd.s32 %s87, 1
      %p91 = scmp.eq.s32.totalorder %s20, 1
      %p92 = scmp.ne.s32.totalorder %s87, %s89
      %p93 = scmp.eq.s32.totalorder %s20, 0
      %p94 = por %p92, %p93
      %p95 = scmp.ne.s32.totalorder %s87, %s89
      %p96 = scmp.eq.s32.totalorder %s25, 1
      %p97 = por %p95, %p96
      %p98 = scmp.ne.s32.totalorder %s89, %s90
      %p99 = scmp.eq.s32.totalorder %s25, 0
      %p100 = por %p98, %p99
      %p101 = scmp.ne.s32.totalorder %s89, %s90
      %p102 = scmp.eq.s32.totalorder %s26, 1
      %p103 = por %p101, %p102
      %p105 = scmp.ne.s32.totalorder %s90, %s104
      %p106 = scmp.eq.s32.totalorder %s26, 0
      %p107 = por %p105, %p106
      %s109 = sadd.s32 %s108, 1
      %p112 = scmp.eq.s32.totalorder %s20, 1
      %p113 = scmp.ne.s32.totalorder %s108, %s110
      %p114 = scmp.eq.s32.totalorder %s20, 0
      %p115 = por %p113, %p114
      %p116 = scmp.ne.s32.totalorder %s108, %s110
      %p117 = scmp.eq.s32.totalorder %s25, 1
      %p118 = por %p116, %p117
      %p119 = scmp.ne.s32.totalorder %s110, %s111
      %p120 = scmp.eq.s32.totalorder %s25, 0
      %p121 = por %p119, %p120
      %p122 = scmp.ne.s32.totalorder %s110, %s111
      %p123 = scmp.eq.s32.totalorder %s26, 1
      %p124 = por %p122, %p123
      %p126 = scmp.ne.s32.totalorder %s111, %s125
      %p127 = scmp.eq.s32.totalorder %s26, 0
      %p128 = por %p126, %p127
      %s130 = sadd.s32 %s129, 1
      %p133 = scmp.eq.s32.totalorder %s20, 1
      %p134 = scmp.ne.s32.totalorder %s129, %s131
      %p135 = scmp.eq.s32.totalorder %s20, 0
      %p136 = por %p134, %p135
      %p137 = scmp.ne.s32.totalorder %s129, %s131
      %p138 = scmp.eq.s32.totalorder %s25, 1
      %p139 = por %p137, %p138
      %p140 = scmp.ne.s32.totalorder %s131, %s132
      %p141 = scmp.eq.s32.totalorder %s25, 0
      %p142 = por %p140, %p141
      %p143 = scmp.ne.s32.totalorder %s131, %s132
      %p144 = scmp.eq.s32.totalorder %s26, 1
      %p145 = por %p143, %p144
      %p147 = scmp.ne.s32.totalorder %s132, %s146
      %p148 = scmp.eq.s32.totalorder %s26, 0
      %p149 = por %p147, %p148
      %s151 = sadd.s32 %s150, 1
      %p154 = scmp.eq.s32.totalorder %s20, 1
      %p155 = scmp.ne.s32.totalorder %s150, %s152
      %p156 = scmp.eq.s32.totalorder %s20, 0
      %p157 = por %p155, %p156
      %p158 = scmp.ne.s32.totalorder %s150, %s152
      %p159 = scmp.eq.s32.totalorder %s25, 1
      %p160 = por %p158, %p159
      %p161 = scmp.ne.s32.totalorder %s152, %s153
      %p162 = scmp.eq.s32.totalorder %s25, 0
      %p163 = por %p161, %p162
      %p164 = scmp.ne.s32.totalorder %s152, %s153
      %p165 = scmp.eq.s32.totalorder %s26, 1
      %p166 = por %p164, %p165
      %p168 = scmp.ne.s32.totalorder %s153, %s167
      %p169 = scmp.eq.s32.totalorder %s26, 0
      %p170 = por %p168, %p169
      %s172 = sadd.s32 %s171, 1
      %p175 = scmp.eq.s32.totalorder %s20, 1
      %p176 = scmp.ne.s32.totalorder %s171, %s173
      %p177 = scmp.eq.s32.totalorder %s20, 0
      %p178 = por %p176, %p177
      %p179 = scmp.ne.s32.totalorder %s171, %s173
      %p180 = scmp.eq.s32.totalorder %s25, 1
      %p181 = por %p179, %p180
      %p182 = scmp.ne.s32.totalorder %s173, %s174
      %p183 = scmp.eq.s32.totalorder %s25, 0
      %p184 = por %p182, %p183
      %p185 = scmp.ne.s32.totalorder %s173, %s174
      %p186 = scmp.eq.s32.totalorder %s26, 1
      %p187 = por %p185, %p186
      %p189 = scmp.ne.s32.totalorder %s174, %s188
      %p190 = scmp.eq.s32.totalorder %s26, 0
      %p191 = por %p189, %p190
      %s193 = sadd.s32 %s192, 1
      %p196 = scmp.eq.s32.totalorder %s20, 1
      %p197 = scmp.ne.s32.totalorder %s192, %s194
      %p198 = scmp.eq.s32.totalorder %s20, 0
      %p199 = por %p197, %p198
      %p200 = scmp.ne.s32.totalorder %s192, %s194
      %p201 = scmp.eq.s32.totalorder %s25, 1
      %p202 = por %p200, %p201
      %p203 = scmp.ne.s32.totalorder %s194, %s195
      %p204 = scmp.eq.s32.totalorder %s25, 0
      %p205 = por %p203, %p204
      %p206 = scmp.ne.s32.totalorder %s194, %s195
      %p207 = scmp.eq.s32.totalorder %s26, 1
      %p208 = por %p206, %p207
      %p210 = scmp.ne.s32.totalorder %s195, %s209
      %p211 = scmp.eq.s32.totalorder %s26, 0
      %p212 = por %p210, %p211
      %s214 = sadd.s32 %s213, 1
      %p217 = scmp.eq.s32.totalorder %s20, 1
      %p218 = scmp.ne.s32.totalorder %s213, %s215
      %p219 = scmp.eq.s32.totalorder %s20, 0
      %p220 = por %p218, %p219
      %p221 = scmp.ne.s32.totalorder %s213, %s215
      %p222 = scmp.eq.s32.totalorder %s25, 1
      %p223 = por %p221, %p222
      %p224 = scmp.ne.s32.totalorder %s215, %s216
      %p225 = scmp.eq.s32.totalorder %s25, 0
      %p226 = por %p224, %p225
      %p227 = scmp.ne.s32.totalorder %s215, %s216
      %p228 = scmp.eq.s32.totalorder %s26, 1
      %p229 = por %p227, %p228
      %p231 = scmp.ne.s32.totalorder %s216, %s230
      %p232 = scmp.eq.s32.totalorder %s26, 0
      %p233 = por %p231, %p232
      %s235 = sadd.s32 %s234, 1
      %p238 = scmp.eq.s32.totalorder %s20, 1
      %p239 = scmp.ne.s32.totalorder %s234, %s236
      %p240 = scmp.eq.s32.totalorder %s20, 0
      %p241 = por %p239, %p240
      %p242 = scmp.ne.s32.totalorder %s234, %s236
      %p243 = scmp.eq.s32.totalorder %s25, 1
      %p244 = por %p242, %p243
      %p245 = scmp.ne.s32.totalorder %s236, %s237
      %p246 = scmp.eq.s32.totalorder %s25, 0
      %p247 = por %p245, %p246
      %p248 = scmp.ne.s32.totalorder %s236, %s237
      %p249 = scmp.eq.s32.totalorder %s26, 1
      %p250 = por %p248, %p249
      %p252 = scmp.ne.s32.totalorder %s237, %s251
      %p253 = scmp.eq.s32.totalorder %s26, 0
      %p254 = por %p252, %p253
      %s255 = ssub.s32 %s27, %s39
      %s256 = ssub.s32 %s28, %s35
      %s257 = sor.u32 %s255, %s256
      %p258 = scmp.eq.s32.totalorder %s257, 0
      %s260 = sadd.s32 %s259, 1
      %s261 = scalar_select %p258, %s259, %s260
      %p264 = pneg %p258
      %p265 = scmp.eq.s32.totalorder %s20, 1
      %p266 = por %p264, %p265
      %p267 = scmp.ne.s32.totalorder %s259, %s262
      %p268 = scmp.eq.s32.totalorder %s20, 0
      %p269 = por %p267, %p268
      %p270 = scmp.ne.s32.totalorder %s259, %s262
      %p271 = scmp.eq.s32.totalorder %s25, 1
      %p272 = por %p270, %p271
      %p273 = scmp.ne.s32.totalorder %s262, %s263
      %p274 = scmp.eq.s32.totalorder %s25, 0
      %p275 = por %p273, %p274
      %p276 = scmp.ne.s32.totalorder %s262, %s263
      %p277 = scmp.eq.s32.totalorder %s26, 1
      %p278 = por %p276, %p277
      %p280 = scmp.ne.s32.totalorder %s263, %s279
      %p281 = scmp.eq.s32.totalorder %s26, 0
      %p282 = por %p280, %p281
      %p283 = scmp.le.s32.totalorder 1, %s20
      %p284 = scmp.lt.s32.totalorder %s20, 3
      %p285 = pnand %p283, %p284
      %p286 = pneg %p285
      // Predicated region
      $region9: #{tpu_custom_call.1} parent=5 // pred_check
        _
      $region10: #{tpu_custom_call.1} parent=5 // pred_check_branch
        %288 = sbr.rel (%p285) target = $region12
      $region11: #{tpu_custom_call.1} parent=5 // pred_region
        %s289 = ssub.s32 %s20, 1
        // Predicated region
        $region13: #{tpu_custom_call.1} parent=11 // pred_check
          %p290 = pneg %p79
        $region14: #{tpu_custom_call.1} parent=11 // pred_check_branch
          %292 = sbr.rel (%p290) target = $region16
        $region15: #{tpu_custom_call.1} parent=11 // pred_region
          %s294 = ssub.s32 48, 48
          %295 = vsyncadd [#allocation3], %s294
          %s297 = sshll.u32 [#allocation2], 4
          %s298 = int_to_ptr.vmem [resolvable:$true] %s297
          %300 = dma.hbm_to_vmem [thread:$0]  %s1, 48, %s298, [#allocation3]
        $region16: #{tpu_custom_call.1} parent=11 // pred_fallthru
          _
        // Predicated region
        $region17: #{tpu_custom_call.1} parent=11 // pred_check
          %p301 = pneg %p100
        $region18: #{tpu_custom_call.1} parent=11 // pred_check_branch
          %303 = sbr.rel (%p301) target = $region20
        $region19: #{tpu_custom_call.1} parent=11 // pred_region
          _
        $region20: #{tpu_custom_call.1} parent=11 // pred_fallthru
          _
        // Predicated region
        $region21: #{tpu_custom_call.1} parent=11 // pred_check
          %p304 = pneg %p121
        $region22: #{tpu_custom_call.1} parent=11 // pred_check_branch
          %306 = sbr.rel (%p304) target = $region24
        $region23: #{tpu_custom_call.1} parent=11 // pred_region
          _
        $region24: #{tpu_custom_call.1} parent=11 // pred_fallthru
          _
        // Predicated region
        $region25: #{tpu_custom_call.1} parent=11 // pred_check
          %p307 = pneg %p142
        $region26: #{tpu_custom_call.1} parent=11 // pred_check_branch
          %309 = sbr.rel (%p307) target = $region28
        $region27: #{tpu_custom_call.1} parent=11 // pred_region
          _
        $region28: #{tpu_custom_call.1} parent=11 // pred_fallthru
          _
        // Predicated region
        $region29: #{tpu_custom_call.1} parent=11 // pred_check
          %p310 = pneg %p163
        $region30: #{tpu_custom_call.1} parent=11 // pred_check_branch
          %312 = sbr.rel (%p310) target = $region32
        $region31: #{tpu_custom_call.1} parent=11 // pred_region
          _
        $region32: #{tpu_custom_call.1} parent=11 // pred_fallthru
          _
        // Predicated region
        $region33: #{tpu_custom_call.1} parent=11 // pred_check
          %p313 = pneg %p184
        $region34: #{tpu_custom_call.1} parent=11 // pred_check_branch
          %315 = sbr.rel (%p313) target = $region36
        $region35: #{tpu_custom_call.1} parent=11 // pred_region
          _
        $region36: #{tpu_custom_call.1} parent=11 // pred_fallthru
          _
        // Predicated region
        $region37: #{tpu_custom_call.1} parent=11 // pred_check
          %p316 = pneg %p205
        $region38: #{tpu_custom_call.1} parent=11 // pred_check_branch
          %318 = sbr.rel (%p316) target = $region40
        $region39: #{tpu_custom_call.1} parent=11 // pred_region
          _
        $region40: #{tpu_custom_call.1} parent=11 // pred_fallthru
          _
        // Predicated region
        $region41: #{tpu_custom_call.1} parent=11 // pred_check
          %p319 = pneg %p226
        $region42: #{tpu_custom_call.1} parent=11 // pred_check_branch
          %321 = sbr.rel (%p319) target = $region44
        $region43: #{tpu_custom_call.1} parent=11 // pred_region
          _
        $region44: #{tpu_custom_call.1} parent=11 // pred_fallthru
          _
        // Predicated region
        $region45: #{tpu_custom_call.1} parent=11 // pred_check
          %p322 = pneg %p247
        $region46: #{tpu_custom_call.1} parent=11 // pred_check_branch
          %324 = sbr.rel (%p322) target = $region48
        $region47: #{tpu_custom_call.1} parent=11 // pred_region
          _
        $region48: #{tpu_custom_call.1} parent=11 // pred_fallthru
          _
      $region12: #{tpu_custom_call.1} parent=5 // pred_fallthru
        _
      %p325 = scmp.lt.s32.totalorder %s20, 2
      // Predicated region
      $region49: #{tpu_custom_call.1} parent=5 // pred_check
        %p326 = pneg %p325
      $region50: #{tpu_custom_call.1} parent=5 // pred_check_branch
        %328 = sbr.rel (%p326) target = $region52
      $region51: #{tpu_custom_call.1} parent=5 // pred_region
        // Predicated region
        $region53: #{tpu_custom_call.1} parent=51 // pred_check
          %p329 = pneg %p52
        $region54: #{tpu_custom_call.1} parent=51 // pred_check_branch
          %331 = sbr.rel (%p329) target = $region56
        $region55: #{tpu_custom_call.1} parent=51 // pred_region
          %p332 = scmp.lt.s32.totalorder %s27, 1
          %s333 = scalar_select %p332, %s27, 1
          %s334 = smul.addr %s333, 3
          %s335 = smul.addr %s334, 8
          %s336 = scalar_lea.vmem %s0, %s335
        $region56: #{tpu_custom_call.1} parent=51 // pred_fallthru
          _
      $region52: #{tpu_custom_call.1} parent=5 // pred_fallthru
        _
      %p337 = scmp.le.s32.totalorder 1, %s20
      %p338 = scmp.lt.s32.totalorder %s20, 3
      %p339 = pnand %p337, %p338
      %p340 = pneg %p339
      // Predicated region
      $region57: #{tpu_custom_call.1} parent=5 // pred_check
        _
      $region58: #{tpu_custom_call.1} parent=5 // pred_check_branch
        %342 = sbr.rel (%p339) target = $region60
      $region59: #{tpu_custom_call.1} parent=5 // pred_region
        %s343 = ssub.s32 %s20, 1
        // Predicated region
        $region61: #{tpu_custom_call.1} parent=59 // pred_check
          %p344 = pneg %p79
        $region62: #{tpu_custom_call.1} parent=59 // pred_check_branch
          %346 = sbr.rel (%p344) target = $region64
        $region63: #{tpu_custom_call.1} parent=59 // pred_region
          %347 = dma.done [#allocation3], 48
        $region64: #{tpu_custom_call.1} parent=59 // pred_fallthru
          _
        %p348 = scmp.lt.s32.totalorder %s29, 1
        %s349 = scalar_select %p348, %s29, 1
        %s350 = smul.addr %s349, 3
        %s351 = smul.addr %s350, 8
        %s352 = scalar_lea.vmem %s0, %s351
        %p353 = pneg %p58
        %p354 = pneg %p55
        %p355 = pneg %p79
        %p356 = pneg %p76
        %p357 = pneg %p100
        %p358 = pneg %p97
        %p359 = pneg %p121
        %p360 = pneg %p118
        %p361 = pneg %p142
        %p362 = pneg %p139
        %p363 = pneg %p163
        %p364 = pneg %p160
        %p365 = pneg %p184
        %p366 = pneg %p181
        %p367 = pneg %p205
        %p368 = pneg %p202
        %p369 = pneg %p226
        %p370 = pneg %p223
        %p371 = pneg %p247
        %p372 = pneg %p244
        %p373 = pneg %p275
        %p374 = pneg %p272
        %s375 = sand.u32 %s262, 1
        %s376 = scalar_lea.sflag [#allocation4], %s375
        %s377 = sand.u32 %s262, 1
        %s378 = smul.addr %s377, 16
        %s379 = scalar_lea.vmem [#allocation5], %s378
        %p380 = scmp.lt.s32.totalorder %s29, 1
        %s381 = scalar_select %p380, %s29, 1
        %s382 = smul.addr %s381, 3
        %s383 = smul.addr %s382, 8
        %s384 = scalar_lea.vmem %s0, %s383
        %v385 = vld [vmem:[%s384] sm:$0xff]
        %v386 = vld [vmem:[%s384 + $0x8] sm:$0xff]
        %v387 = vld [vmem:[%s384 + $0x10] sm:$0xff]
        %v388 = vld [vmem:[#allocation2] sm:$0x7]
        %v389 = vld [vmem:[%s2] sm:$0xff]
        %v390 = vld [vmem:[%s2 + $0x8] sm:$0xff]
        %v391 = vld [vmem:[%s3] sm:$0xff]
        %v392 = vld [vmem:[%s3 + $0x8] sm:$0xff]
        %394 = vset.pattern.permute.xlu0 0
        %395 = vperm.xlu0 %394, %v391
        %v396 = vpop.permute.xlu0 %395
        %399 = vset.pattern.permute.xlu0 0
        %400 = vperm.xlu0 %399, %v392
        %v401 = vpop.permute.xlu0 %400
        %vm403 = vcmask 64512
        %v405 = vsel %vm403, %v389, 0
        %v408 = vsel %vm403, %v390, 0
        %410 = vmatprep.subr.mxu0 0.0
        %411 = vmatpush1.msra.mxu0 0.0
        %412 = vmatprep.subr.mxu0 0.0
        %413 = vmatpush1.msra.mxu0 0.0
        %414 = vmatprep.subr.mxu0 0.0
        %415 = vmatpush1.msra.mxu0 0.0
        %416 = vmatprep.subr.mxu0 0.0
        %417 = vmatpush1.msra.mxu0 0.0
        %418 = vmatprep.subr.mxu0 0.0
        %419 = vmatpush1.msra.mxu0 0.0
        %420 = vmatprep.subr.mxu0 0.0
        %421 = vmatpush1.msra.mxu0 0.0
        %422 = vmatprep.subr.mxu0 0.0
        %423 = vmatpush1.msra.mxu0 0.0
        %424 = vmatprep.subr.mxu0 0.0
        %425 = vmatpush1.msra.mxu0 0.0
        %426 = vmatprep.subr.mxu0 0.0
        %427 = vmatpush1.msra.mxu0 0.0
        %428 = vmatprep.subr.mxu0 0.0
        %429 = vmatpush1.msra.mxu0 0.0
        %430 = vmatprep.subr.mxu0 0.0
        %431 = vmatpush1.msra.mxu0 0.0
        %432 = vmatprep.subr.mxu0 0.0
        %433 = vmatpush1.msra.mxu0 0.0
        %434 = vmatprep.subr.mxu0 0.0
        %435 = vmatpush1.msra.mxu0 0.0
        %436 = vmatprep.subr.mxu0 0.0
        %437 = vmatpush1.msra.mxu0 0.0
        %438 = vmatprep.subr.mxu0 0.0
        %439 = vmatpush1.msra.mxu0 0.0
        %440 = vmatprep.subr.mxu0 %v386
        %441 = vmatpush1.msra.mxu0 %v385
        %442 = vmatprep.subr.mxu0 0.0
        %443 = vmatpush2.msra.mxu0 0.0
        %444 = vmatprep.subr.mxu0 0.0
        %445 = vmatpush2.msra.mxu0 0.0
        %446 = vmatprep.subr.mxu0 0.0
        %447 = vmatpush2.msra.mxu0 0.0
        %448 = vmatprep.subr.mxu0 0.0
        %449 = vmatpush2.msra.mxu0 0.0
        %450 = vmatprep.subr.mxu0 0.0
        %451 = vmatpush2.msra.mxu0 0.0
        %452 = vmatprep.subr.mxu0 0.0
        %453 = vmatpush2.msra.mxu0 0.0
        %454 = vmatprep.subr.mxu0 0.0
        %455 = vmatpush2.msra.mxu0 0.0
        %456 = vmatprep.subr.mxu0 0.0
        %457 = vmatpush2.msra.mxu0 0.0
        %458 = vmatprep.subr.mxu0 0.0
        %459 = vmatpush2.msra.mxu0 0.0
        %460 = vmatprep.subr.mxu0 0.0
        %461 = vmatpush2.msra.mxu0 0.0
        %462 = vmatprep.subr.mxu0 0.0
        %463 = vmatpush2.msra.mxu0 0.0
        %464 = vmatprep.subr.mxu0 0.0
        %465 = vmatpush2.msra.mxu0 0.0
        %466 = vmatprep.subr.mxu0 0.0
        %467 = vmatpush2.msra.mxu0 0.0
        %468 = vmatprep.subr.mxu0 0.0
        %469 = vmatpush2.msra.mxu0 0.0
        %470 = vmatprep.subr.mxu0 0.0
        %471 = vmatpush2.msra.mxu0 0.0
        %472 = vmatprep.subr.mxu0 0.0
        %473 = vmatpush2.msra.mxu0 0.0
        %474 = vmatprep.mubr.f32.mxu0 0.0
        %475 = vmatmul.mubr.f32.gmra.mxu0 %v405
        %v476 = vpop.f32.mrf.mxu0
        %v477 = vadd.f32 %v396, %v476
        %v478 = vpop.f32.mrf.mxu0
        %v479 = vadd.f32 %v396, %v478
        %480 = vmatprep.mubr.f32.mxu0 0.0
        %481 = vmatmul.mubr.f32.gmra.mxu0 %v408
        %v482 = vpop.f32.mrf.mxu0
        %v483 = vadd.f32 %v401, %v482
        %v484 = vpop.f32.mrf.mxu0
        %v485 = vadd.f32 %v401, %v484
        %486 = vdwg.mxu0
        %487 = vmatprep.subr.mxu0 0.0
        %488 = vmatpush1.msra.mxu0 0.0
        %489 = vmatprep.subr.mxu0 0.0
        %490 = vmatpush1.msra.mxu0 0.0
        %491 = vmatprep.subr.mxu0 0.0
        %492 = vmatpush1.msra.mxu0 0.0
        %493 = vmatprep.subr.mxu0 0.0
        %494 = vmatpush1.msra.mxu0 0.0
        %495 = vmatprep.subr.mxu0 0.0
        %496 = vmatpush1.msra.mxu0 0.0
        %497 = vmatprep.subr.mxu0 0.0
        %498 = vmatpush1.msra.mxu0 0.0
        %499 = vmatprep.subr.mxu0 0.0
        %500 = vmatpush1.msra.mxu0 0.0
        %501 = vmatprep.subr.mxu0 0.0
        %502 = vmatpush1.msra.mxu0 0.0
        %503 = vmatprep.subr.mxu0 0.0
        %504 = vmatpush1.msra.mxu0 0.0
        %505 = vmatprep.subr.mxu0 0.0
        %506 = vmatpush1.msra.mxu0 0.0
        %507 = vmatprep.subr.mxu0 0.0
        %508 = vmatpush1.msra.mxu0 0.0
        %509 = vmatprep.subr.mxu0 0.0
        %510 = vmatpush1.msra.mxu0 0.0
        %511 = vmatprep.subr.mxu0 0.0
        %512 = vmatpush1.msra.mxu0 0.0
        %513 = vmatprep.subr.mxu0 0.0
        %514 = vmatpush1.msra.mxu0 0.0
        %515 = vmatprep.subr.mxu0 0.0
        %516 = vmatpush1.msra.mxu0 0.0
        %517 = vmatprep.subr.mxu0 0.0
        %518 = vmatpush1.msra.mxu0 %v387
        %519 = vmatprep.subr.mxu0 0.0
        %520 = vmatpush2.msra.mxu0 0.0
        %521 = vmatprep.subr.mxu0 0.0
        %522 = vmatpush2.msra.mxu0 0.0
        %523 = vmatprep.subr.mxu0 0.0
        %524 = vmatpush2.msra.mxu0 0.0
        %525 = vmatprep.subr.mxu0 0.0
        %526 = vmatpush2.msra.mxu0 0.0
        %527 = vmatprep.subr.mxu0 0.0
        %528 = vmatpush2.msra.mxu0 0.0
        %529 = vmatprep.subr.mxu0 0.0
        %530 = vmatpush2.msra.mxu0 0.0
        %531 = vmatprep.subr.mxu0 0.0
        %532 = vmatpush2.msra.mxu0 0.0
        %533 = vmatprep.subr.mxu0 0.0
        %534 = vmatpush2.msra.mxu0 0.0
        %535 = vmatprep.subr.mxu0 0.0
        %536 = vmatpush2.msra.mxu0 0.0
        %537 = vmatprep.subr.mxu0 0.0
        %538 = vmatpush2.msra.mxu0 0.0
        %539 = vmatprep.subr.mxu0 0.0
        %540 = vmatpush2.msra.mxu0 0.0
        %541 = vmatprep.subr.mxu0 0.0
        %542 = vmatpush2.msra.mxu0 0.0
        %543 = vmatprep.subr.mxu0 0.0
        %544 = vmatpush2.msra.mxu0 0.0
        %545 = vmatprep.subr.mxu0 0.0
        %546 = vmatpush2.msra.mxu0 0.0
        %547 = vmatprep.subr.mxu0 0.0
        %548 = vmatpush2.msra.mxu0 0.0
        %549 = vmatprep.subr.mxu0 0.0
        %550 = vmatpush2.msra.mxu0 0.0
        %551 = vmatprep.mubr.f32.mxu0 0.0
        %552 = vmatmul.mubr.f32.gmra.mxu0 %v405
        %v553 = vpop.f32.mrf.mxu0
        %v554 = vadd.f32 %v396, %v553
        %v555 = vpop.f32.mrf.mxu0
        %556 = vmatprep.mubr.f32.mxu0 0.0
        %557 = vmatmul.mubr.f32.gmra.mxu0 %v408
        %v558 = vpop.f32.mrf.mxu0
        %v559 = vadd.f32 %v401, %v558
        %v560 = vpop.f32.mrf.mxu0
        %561 = vdwg.mxu0
        %v562 = vmax.f32 %v477, 0.0
        %v563 = vmax.f32 %v479, 0.0
        %v564 = vmax.f32 %v554, 0.0
        %v565 = vmax.f32 %v483, 0.0
        %v566 = vmax.f32 %v485, 0.0
        %v567 = vmax.f32 %v559, 0.0
        %v568 = vmin.f32 %v562, 6.0
        %v569 = vmin.f32 %v563, 6.0
        %v570 = vmin.f32 %v564, 6.0
        %v571 = vmin.f32 %v565, 6.0
        %v572 = vmin.f32 %v566, 6.0
        %v573 = vmin.f32 %v567, 6.0
        %v575 = vlaneseq
        %v576 = vshrl.u32 %v575, 7
        %v577 = vsub.s32 0, %v576
        %v578 = vrot.slane %v388, %v577
        %v579 = vlaneseq
        %v580 = vshrl.u32 %v579, 7
        %v581 = vsub.s32 1, %v580
        %v582 = vrot.slane %v388, %v581
        %v583 = vlaneseq
        %v584 = vshrl.u32 %v583, 7
        %v585 = vsub.s32 2, %v584
        %v586 = vrot.slane %v388, %v585
        %v590 = vmul.f32 %v568, %v578
        %v591 = vmul.f32 %v569, %v582
        %v592 = vmul.f32 %v570, %v586
        %v593 = vmul.f32 %v571, %v578
        %v594 = vmul.f32 %v572, %v582
        %v595 = vmul.f32 %v573, %v586
        %v596 = vld [vmem:[%s4] sm:$0xff]
        %v597 = vld [vmem:[%s4 + $0x8] sm:$0xff]
        %v598 = vld [vmem:[%s5] sm:$0xff]
        %v599 = vld [vmem:[%s5 + $0x8] sm:$0xff]
        %601 = vset.pattern.permute.xlu0 0
        %602 = vperm.xlu0 %601, %v596
        %v603 = vpop.permute.xlu0 %602
        %606 = vset.pattern.permute.xlu0 0
        %607 = vperm.xlu0 %606, %v597
        %v608 = vpop.permute.xlu0 %607
        %v610 = vmul.f32 %v590, %v603
        %v611 = vmul.f32 %v591, %v603
        %v612 = vmul.f32 %v593, %v608
        %v613 = vmul.f32 %v594, %v608
        %v614 = vadd.f32 %v610, 0.0
        %v615 = vadd.f32 %v611, 0.0
        %v616 = vadd.f32 %v612, 0.0
        %v617 = vadd.f32 %v613, 0.0
        %618 = vset.pattern.permute.xlu0 1
        %619 = vperm.xlu0 %618, %v596
        %v620 = vpop.permute.xlu0 %619
        %622 = vset.pattern.permute.xlu0 1
        %623 = vperm.xlu0 %622, %v597
        %v624 = vpop.permute.xlu0 %623
        %v626 = vmul.f32 %v590, %v620
        %v627 = vmul.f32 %v591, %v620
        %v628 = vmul.f32 %v592, %v620
        %v629 = vmul.f32 %v593, %v624
        %v630 = vmul.f32 %v594, %v624
        %v631 = vmul.f32 %v595, %v624
        %v632 = vadd.f32 %v626, 0.0
        %v633 = vadd.f32 %v627, 0.0
        %v634 = vadd.f32 %v628, 0.0
        %v635 = vadd.f32 %v629, 0.0
        %v636 = vadd.f32 %v630, 0.0
        %v637 = vadd.f32 %v631, 0.0
        %638 = vset.pattern.permute.xlu0 2
        %639 = vperm.xlu0 %638, %v596
        %v640 = vpop.permute.xlu0 %639
        %642 = vset.pattern.permute.xlu0 2
        %643 = vperm.xlu0 %642, %v597
        %v644 = vpop.permute.xlu0 %643
        %v646 = vmul.f32 %v590, %v640
        %v647 = vmul.f32 %v591, %v640
        %v648 = vmul.f32 %v592, %v640
        %v649 = vmul.f32 %v593, %v644
        %v650 = vmul.f32 %v594, %v644
        %v651 = vmul.f32 %v595, %v644
        %v652 = vadd.f32 %v646, 0.0
        %v653 = vadd.f32 %v647, 0.0
        %v654 = vadd.f32 %v648, 0.0
        %v655 = vadd.f32 %v649, 0.0
        %v656 = vadd.f32 %v650, 0.0
        %v657 = vadd.f32 %v651, 0.0
        %658 = vset.pattern.permute.xlu0 3
        %659 = vperm.xlu0 %658, %v596
        %v660 = vpop.permute.xlu0 %659
        %662 = vset.pattern.permute.xlu0 3
        %663 = vperm.xlu0 %662, %v597
        %v664 = vpop.permute.xlu0 %663
        %v666 = vmul.f32 %v590, %v660
        %v667 = vmul.f32 %v591, %v660
        %v668 = vmul.f32 %v592, %v660
        %v669 = vmul.f32 %v593, %v664
        %v670 = vmul.f32 %v594, %v664
        %v671 = vmul.f32 %v595, %v664
        %678 = vrot.lane.b32.xlu0 %v666, 112
        %v679 = vpop.permute.xlu0 %678
        %680 = vrot.lane.b32.xlu0 %v667, 112
        %v681 = vpop.permute.xlu0 %680
        %682 = vrot.lane.b32.xlu0 %v668, 112
        %v683 = vpop.permute.xlu0 %682
        %684 = vrot.lane.b32.xlu0 %v669, 112
        %v685 = vpop.permute.xlu0 %684
        %686 = vrot.lane.b32.xlu0 %v670, 112
        %v687 = vpop.permute.xlu0 %686
        %688 = vrot.lane.b32.xlu0 %v671, 112
        %v689 = vpop.permute.xlu0 %688
        %vm690 = vcmask 916480
        %v691 = vsel %vm690, %v679, %v681
        %v692 = vsel %vm690, %v681, %v683
        %v693 = vsel %vm690, %v685, %v687
        %v694 = vsel %vm690, %v687, %v689
        %v699 = vadd.f32 %v614, %v691
        %v700 = vadd.f32 %v615, %v692
        %v701 = vadd.f32 %v616, %v693
        %v702 = vadd.f32 %v617, %v694
        %703 = vset.pattern.permute.xlu0 4
        %704 = vperm.xlu0 %703, %v596
        %v705 = vpop.permute.xlu0 %704
        %707 = vset.pattern.permute.xlu0 4
        %708 = vperm.xlu0 %707, %v597
        %v709 = vpop.permute.xlu0 %708
        %v711 = vmul.f32 %v590, %v705
        %v712 = vmul.f32 %v591, %v705
        %v713 = vmul.f32 %v592, %v705
        %v714 = vmul.f32 %v593, %v709
        %v715 = vmul.f32 %v594, %v709
        %v716 = vmul.f32 %v595, %v709
        %723 = vrot.lane.b32.xlu0 %v711, 112
        %v724 = vpop.permute.xlu0 %723
        %725 = vrot.lane.b32.xlu0 %v712, 112
        %v726 = vpop.permute.xlu0 %725
        %727 = vrot.lane.b32.xlu0 %v713, 112
        %v728 = vpop.permute.xlu0 %727
        %729 = vrot.lane.b32.xlu0 %v714, 112
        %v730 = vpop.permute.xlu0 %729
        %731 = vrot.lane.b32.xlu0 %v715, 112
        %v732 = vpop.permute.xlu0 %731
        %733 = vrot.lane.b32.xlu0 %v716, 112
        %v734 = vpop.permute.xlu0 %733
        %v735 = vsel %vm690, %v724, %v726
        %v736 = vsel %vm690, %v726, %v728
        %v737 = vsel %vm690, %v730, %v732
        %v738 = vsel %vm690, %v732, %v734
        %v745 = vadd.f32 %v632, %v735
        %v746 = vadd.f32 %v633, %v736
        %v747 = vadd.f32 %v634, %v728
        %v748 = vadd.f32 %v635, %v737
        %v749 = vadd.f32 %v636, %v738
        %v750 = vadd.f32 %v637, %v734
        %751 = vset.pattern.permute.xlu0 5
        %752 = vperm.xlu0 %751, %v596
        %v753 = vpop.permute.xlu0 %752
        %755 = vset.pattern.permute.xlu0 5
        %756 = vperm.xlu0 %755, %v597
        %v757 = vpop.permute.xlu0 %756
        %v759 = vmul.f32 %v590, %v753
        %v760 = vmul.f32 %v591, %v753
        %v761 = vmul.f32 %v592, %v753
        %v762 = vmul.f32 %v593, %v757
        %v763 = vmul.f32 %v594, %v757
        %v764 = vmul.f32 %v595, %v757
        %771 = vrot.lane.b32.xlu0 %v759, 112
        %v772 = vpop.permute.xlu0 %771
        %773 = vrot.lane.b32.xlu0 %v760, 112
        %v774 = vpop.permute.xlu0 %773
        %775 = vrot.lane.b32.xlu0 %v761, 112
        %v776 = vpop.permute.xlu0 %775
        %777 = vrot.lane.b32.xlu0 %v762, 112
        %v778 = vpop.permute.xlu0 %777
        %779 = vrot.lane.b32.xlu0 %v763, 112
        %v780 = vpop.permute.xlu0 %779
        %781 = vrot.lane.b32.xlu0 %v764, 112
        %v782 = vpop.permute.xlu0 %781
        %v783 = vsel %vm690, %v772, %v774
        %v784 = vsel %vm690, %v774, %v776
        %v785 = vsel %vm690, %v778, %v780
        %v786 = vsel %vm690, %v780, %v782
        %v793 = vadd.f32 %v652, %v783
        %v794 = vadd.f32 %v653, %v784
        %v795 = vadd.f32 %v654, %v776
        %v796 = vadd.f32 %v655, %v785
        %v797 = vadd.f32 %v656, %v786
        %v798 = vadd.f32 %v657, %v782
        %799 = vset.pattern.permute.xlu0 6
        %800 = vperm.xlu0 %799, %v596
        %v801 = vpop.permute.xlu0 %800
        %803 = vset.pattern.permute.xlu0 6
        %804 = vperm.xlu0 %803, %v597
        %v805 = vpop.permute.xlu0 %804
        %v807 = vmul.f32 %v590, %v801
        %v808 = vmul.f32 %v591, %v801
        %v809 = vmul.f32 %v592, %v801
        %v810 = vmul.f32 %v593, %v805
        %v811 = vmul.f32 %v594, %v805
        %v812 = vmul.f32 %v595, %v805
        %819 = vrot.lane.b32.xlu0 %v807, 96
        %v820 = vpop.permute.xlu0 %819
        %821 = vrot.lane.b32.xlu0 %v808, 96
        %v822 = vpop.permute.xlu0 %821
        %823 = vrot.lane.b32.xlu0 %v809, 96
        %v824 = vpop.permute.xlu0 %823
        %825 = vrot.lane.b32.xlu0 %v810, 96
        %v826 = vpop.permute.xlu0 %825
        %827 = vrot.lane.b32.xlu0 %v811, 96
        %v828 = vpop.permute.xlu0 %827
        %829 = vrot.lane.b32.xlu0 %v812, 96
        %v830 = vpop.permute.xlu0 %829
        %vm831 = vcmask 785408
        %v832 = vsel %vm831, %v820, %v822
        %v833 = vsel %vm831, %v822, %v824
        %v834 = vsel %vm831, %v826, %v828
        %v835 = vsel %vm831, %v828, %v830
        %v840 = vadd.f32 %v699, %v832
        %v841 = vadd.f32 %v700, %v833
        %v842 = vadd.f32 %v701, %v834
        %v843 = vadd.f32 %v702, %v835
        %844 = vset.pattern.permute.xlu0 7
        %845 = vperm.xlu0 %844, %v596
        %v846 = vpop.permute.xlu0 %845
        %848 = vset.pattern.permute.xlu0 7
        %849 = vperm.xlu0 %848, %v597
        %v850 = vpop.permute.xlu0 %849
        %v852 = vmul.f32 %v590, %v846
        %v853 = vmul.f32 %v591, %v846
        %v854 = vmul.f32 %v592, %v846
        %v855 = vmul.f32 %v593, %v850
        %v856 = vmul.f32 %v594, %v850
        %v857 = vmul.f32 %v595, %v850
        %864 = vrot.lane.b32.xlu0 %v852, 96
        %v865 = vpop.permute.xlu0 %864
        %866 = vrot.lane.b32.xlu0 %v853, 96
        %v867 = vpop.permute.xlu0 %866
        %868 = vrot.lane.b32.xlu0 %v854, 96
        %v869 = vpop.permute.xlu0 %868
        %870 = vrot.lane.b32.xlu0 %v855, 96
        %v871 = vpop.permute.xlu0 %870
        %872 = vrot.lane.b32.xlu0 %v856, 96
        %v873 = vpop.permute.xlu0 %872
        %874 = vrot.lane.b32.xlu0 %v857, 96
        %v875 = vpop.permute.xlu0 %874
        %v876 = vsel %vm831, %v865, %v867
        %v877 = vsel %vm831, %v867, %v869
        %v878 = vsel %vm831, %v871, %v873
        %v879 = vsel %vm831, %v873, %v875
        %v886 = vadd.f32 %v745, %v876
        %v887 = vadd.f32 %v746, %v877
        %v888 = vadd.f32 %v747, %v869
        %v889 = vadd.f32 %v748, %v878
        %v890 = vadd.f32 %v749, %v879
        %v891 = vadd.f32 %v750, %v875
        %892 = vset.pattern.permute.xlu0 8
        %893 = vperm.xlu0 %892, %v596
        %v894 = vpop.permute.xlu0 %893
        %896 = vset.pattern.permute.xlu0 8
        %897 = vperm.xlu0 %896, %v597
        %v898 = vpop.permute.xlu0 %897
        %v900 = vmul.f32 %v590, %v894
        %v901 = vmul.f32 %v591, %v894
        %v902 = vmul.f32 %v592, %v894
        %v903 = vmul.f32 %v593, %v898
        %v904 = vmul.f32 %v594, %v898
        %v905 = vmul.f32 %v595, %v898
        %912 = vrot.lane.b32.xlu0 %v900, 96
        %v913 = vpop.permute.xlu0 %912
        %914 = vrot.lane.b32.xlu0 %v901, 96
        %v915 = vpop.permute.xlu0 %914
        %916 = vrot.lane.b32.xlu0 %v902, 96
        %v917 = vpop.permute.xlu0 %916
        %918 = vrot.lane.b32.xlu0 %v903, 96
        %v919 = vpop.permute.xlu0 %918
        %920 = vrot.lane.b32.xlu0 %v904, 96
        %v921 = vpop.permute.xlu0 %920
        %922 = vrot.lane.b32.xlu0 %v905, 96
        %v923 = vpop.permute.xlu0 %922
        %v924 = vsel %vm831, %v913, %v915
        %v925 = vsel %vm831, %v915, %v917
        %v926 = vsel %vm831, %v919, %v921
        %v927 = vsel %vm831, %v921, %v923
        %v934 = vadd.f32 %v793, %v924
        %v935 = vadd.f32 %v794, %v925
        %v936 = vadd.f32 %v795, %v917
        %v937 = vadd.f32 %v796, %v926
        %v938 = vadd.f32 %v797, %v927
        %v939 = vadd.f32 %v798, %v923
        %v940 = vld [vmem:[%s8] sm:$0x3]
        %v942 = vlaneseq
        %v943 = vshrl.u32 %v942, 7
        %v944 = vsub.s32 0, %v943
        %v945 = vrot.slane %v940, %v944
        %v946 = vlaneseq
        %v947 = vshrl.u32 %v946, 7
        %v948 = vsub.s32 1, %v947
        %v949 = vrot.slane %v940, %v948
        %v952 = vmul.f32 %v840, %v945
        %v953 = vmul.f32 %v841, %v949
        %v954 = vmul.f32 %v842, %v945
        %v955 = vmul.f32 %v843, %v949
        %960 = vrot.lane.b32.xlu0 %v952, 1
        %v961 = vpop.permute.xlu0 %960
        %962 = vrot.lane.b32.xlu0 %v953, 1
        %v963 = vpop.permute.xlu0 %962
        %964 = vrot.lane.b32.xlu0 %v954, 1
        %v965 = vpop.permute.xlu0 %964
        %966 = vrot.lane.b32.xlu0 %v955, 1
        %v967 = vpop.permute.xlu0 %966
        %vm968 = vcmask 7168
        %v969 = vsel %vm968, %v961, %v963
        %v970 = vsel %vm968, %v965, %v967
        %v977 = vadd.f32 %v886, %v961
        %v978 = vadd.f32 %v887, %v969
        %v979 = vadd.f32 %v888, %v963
        %v980 = vadd.f32 %v889, %v965
        %v981 = vadd.f32 %v890, %v970
        %v982 = vadd.f32 %v891, %v967
        %v983 = vld [vmem:[%s9] sm:$0x3]
        %v985 = vlaneseq
        %v986 = vshrl.u32 %v985, 7
        %v987 = vsub.s32 0, %v986
        %v988 = vrot.slane %v983, %v987
        %v989 = vlaneseq
        %v990 = vshrl.u32 %v989, 7
        %v991 = vsub.s32 1, %v990
        %v992 = vrot.slane %v983, %v991
        %993 = vrot.lane.b32.xlu0 %v988, 2
        %v994 = vpop.permute.xlu0 %993
        %995 = vrot.lane.b32.xlu0 %v992, 2
        %v996 = vpop.permute.xlu0 %995
        %vm997 = vcmask 15360
        %v998 = vsel %vm997, %v994, %v996
        %v1002 = vmul.f32 %v934, %v994
        %v1003 = vmul.f32 %v935, %v998
        %v1004 = vmul.f32 %v936, %v996
        %v1005 = vmul.f32 %v937, %v994
        %v1006 = vmul.f32 %v938, %v998
        %v1007 = vmul.f32 %v939, %v996
        %1014 = vrot.lane.b32.xlu0 %v1002, 127
        %v1015 = vpop.permute.xlu0 %1014
        %1016 = vrot.lane.b32.xlu0 %v1003, 127
        %v1017 = vpop.permute.xlu0 %1016
        %1018 = vrot.lane.b32.xlu0 %v1004, 127
        %v1019 = vpop.permute.xlu0 %1018
        %1020 = vrot.lane.b32.xlu0 %v1005, 127
        %v1021 = vpop.permute.xlu0 %1020
        %1022 = vrot.lane.b32.xlu0 %v1006, 127
        %v1023 = vpop.permute.xlu0 %1022
        %1024 = vrot.lane.b32.xlu0 %v1007, 127
        %v1025 = vpop.permute.xlu0 %1024
        %vm1026 = vcmask 1039360
        %v1027 = vsel %vm1026, %v1015, %v1017
        %v1028 = vsel %vm1026, %v1017, %v1019
        %v1029 = vsel %vm1026, %v1021, %v1023
        %v1030 = vsel %vm1026, %v1023, %v1025
        %v1037 = vadd.f32 %v977, %v1027
        %v1038 = vadd.f32 %v978, %v1028
        %v1039 = vadd.f32 %v979, %v1019
        %v1040 = vadd.f32 %v980, %v1029
        %v1041 = vadd.f32 %v981, %v1030
        %v1042 = vadd.f32 %v982, %v1025
        %1044 = vset.pattern.permute.xlu0 0
        %1045 = vperm.xlu0 %1044, %v598
        %v1046 = vpop.permute.xlu0 %1045
        %1049 = vset.pattern.permute.xlu0 0
        %1050 = vperm.xlu0 %1049, %v599
        %v1051 = vpop.permute.xlu0 %1050
        %v1053 = vadd.f32 %v1037, %v1046
        %v1054 = vadd.f32 %v1038, %v1046
        %v1055 = vadd.f32 %v1039, %v1046
        %v1056 = vadd.f32 %v1040, %v1051
        %v1057 = vadd.f32 %v1041, %v1051
        %v1058 = vadd.f32 %v1042, %v1051
        %v1059 = vmax.f32 %v1053, 0.0
        %v1060 = vmax.f32 %v1054, 0.0
        %v1061 = vmax.f32 %v1055, 0.0
        %v1062 = vmax.f32 %v1056, 0.0
        %v1063 = vmax.f32 %v1057, 0.0
        %v1064 = vmax.f32 %v1058, 0.0
        %v1065 = vmin.f32 %v1059, 6.0
        %v1066 = vmin.f32 %v1060, 6.0
        %v1067 = vmin.f32 %v1061, 6.0
        %v1068 = vmin.f32 %v1062, 6.0
        %v1069 = vmin.f32 %v1063, 6.0
        %v1070 = vmin.f32 %v1064, 6.0
        %v1071 = vld [vmem:[%s6] sm:$0xff]
        %1078 = vrot.lane.b32.xlu0 %v1065, 127
        %v1079 = vpop.permute.xlu0 %1078
        %1080 = vrot.lane.b32.xlu0 %v1066, 127
        %v1081 = vpop.permute.xlu0 %1080
        %1082 = vrot.lane.b32.xlu0 %v1067, 127
        %v1083 = vpop.permute.xlu0 %1082
        %1084 = vrot.lane.b32.xlu0 %v1068, 127
        %v1085 = vpop.permute.xlu0 %1084
        %1086 = vrot.lane.b32.xlu0 %v1069, 127
        %v1087 = vpop.permute.xlu0 %1086
        %1088 = vrot.lane.b32.xlu0 %v1070, 127
        %v1089 = vpop.permute.xlu0 %1088
        %v1090 = vsel %vm1026, %v1079, %v1081
        %v1091 = vsel %vm1026, %v1081, %v1083
        %v1092 = vsel %vm1026, %v1085, %v1087
        %v1093 = vsel %vm1026, %v1087, %v1089
        %1101 = vrot.lane.b32.xlu0 %v385, 111
        %v1102 = vpop.permute.xlu0 %1101
        %1103 = vrot.lane.b32.xlu0 %v386, 111
        %v1104 = vpop.permute.xlu0 %1103
        %1105 = vrot.lane.b32.xlu0 %v387, 111
        %v1106 = vpop.permute.xlu0 %1105
        %vm1107 = vcmask 908288
        %v1108 = vsel %vm1107, %v1102, %v1104
        %v1109 = vsel %vm1107, %v1104, %v1106
        %vm1112 = vcmask 130048
        %v1114 = vsel %vm1112, %v1071, 0
        %1116 = vmatprep.subr.mxu0 0.0
        %1117 = vmatpush1.msra.mxu0 0.0
        %1118 = vmatprep.subr.mxu0 0.0
        %1119 = vmatpush1.msra.mxu0 0.0
        %1120 = vmatprep.subr.mxu0 0.0
        %1121 = vmatpush1.msra.mxu0 0.0
        %1122 = vmatprep.subr.mxu0 0.0
        %1123 = vmatpush1.msra.mxu0 0.0
        %1124 = vmatprep.subr.mxu0 0.0
        %1125 = vmatpush1.msra.mxu0 0.0
        %1126 = vmatprep.subr.mxu0 0.0
        %1127 = vmatpush1.msra.mxu0 0.0
        %1128 = vmatprep.subr.mxu0 0.0
        %1129 = vmatpush1.msra.mxu0 0.0
        %1130 = vmatprep.subr.mxu0 0.0
        %1131 = vmatpush1.msra.mxu0 0.0
        %1132 = vmatprep.subr.mxu0 0.0
        %1133 = vmatpush1.msra.mxu0 0.0
        %1134 = vmatprep.subr.mxu0 0.0
        %1135 = vmatpush1.msra.mxu0 0.0
        %1136 = vmatprep.subr.mxu0 0.0
        %1137 = vmatpush1.msra.mxu0 0.0
        %1138 = vmatprep.subr.mxu0 0.0
        %1139 = vmatpush1.msra.mxu0 0.0
        %1140 = vmatprep.subr.mxu0 0.0
        %1141 = vmatpush1.msra.mxu0 0.0
        %1142 = vmatprep.subr.mxu0 0.0
        %1143 = vmatpush1.msra.mxu0 0.0
        %1144 = vmatprep.subr.mxu0 %v1093
        %1145 = vmatpush1.msra.mxu0 %v1092
        %1146 = vmatprep.subr.mxu0 %v1091
        %1147 = vmatpush1.msra.mxu0 %v1090
        %1148 = vmatprep.subr.mxu0 0.0
        %1149 = vmatpush2.msra.mxu0 0.0
        %1150 = vmatprep.subr.mxu0 0.0
        %1151 = vmatpush2.msra.mxu0 0.0
        %1152 = vmatprep.subr.mxu0 0.0
        %1153 = vmatpush2.msra.mxu0 0.0
        %1154 = vmatprep.subr.mxu0 0.0
        %1155 = vmatpush2.msra.mxu0 0.0
        %1156 = vmatprep.subr.mxu0 0.0
        %1157 = vmatpush2.msra.mxu0 0.0
        %1158 = vmatprep.subr.mxu0 0.0
        %1159 = vmatpush2.msra.mxu0 0.0
        %1160 = vmatprep.subr.mxu0 0.0
        %1161 = vmatpush2.msra.mxu0 0.0
        %1162 = vmatprep.subr.mxu0 0.0
        %1163 = vmatpush2.msra.mxu0 0.0
        %1164 = vmatprep.subr.mxu0 0.0
        %1165 = vmatpush2.msra.mxu0 0.0
        %1166 = vmatprep.subr.mxu0 0.0
        %1167 = vmatpush2.msra.mxu0 0.0
        %1168 = vmatprep.subr.mxu0 0.0
        %1169 = vmatpush2.msra.mxu0 0.0
        %1170 = vmatprep.subr.mxu0 0.0
        %1171 = vmatpush2.msra.mxu0 0.0
        %1172 = vmatprep.subr.mxu0 0.0
        %1173 = vmatpush2.msra.mxu0 0.0
        %1174 = vmatprep.subr.mxu0 0.0
        %1175 = vmatpush2.msra.mxu0 0.0
        %1176 = vmatprep.subr.mxu0 0.0
        %1177 = vmatpush2.msra.mxu0 0.0
        %1178 = vmatprep.subr.mxu0 0.0
        %1179 = vmatpush2.msra.mxu0 0.0
        %1180 = vmatprep.mubr.f32.mxu0 0.0
        %1181 = vmatmul.mubr.f32.gmra.mxu0 %v1114
        %v1182 = vpop.f32.mrf.mxu0
        %v1183 = vadd.f32 %v1108, %v1182
        %v1184 = vpop.f32.mrf.mxu0
        %v1185 = vadd.f32 %v1109, %v1184
        %1186 = vdwg.mxu0
        %v1187 = vld [vmem:[%s7] sm:$0xff]
        %1189 = vset.pattern.permute.xlu0 0
        %1190 = vperm.xlu0 %1189, %v1187
        %v1191 = vpop.permute.xlu0 %1190
        %v1193 = vadd.f32 %v1183, %v1191
        %v1194 = vadd.f32 %v1185, %v1191
        %v1197 = vcombine.low %v1193, %v1194
        %v1198 = vcombine.high %v1193, %v1194
        %v1200 = vunpack.c.l.s4 1966171168
        %v1201 = vunpack.c.0.s8 %v1200
        %v1202 = vlaneseq
        %v1203 = vshrl.u32 %v1202, 7
        %v1204 = vsub.s32 %v1201, %v1203
        %v1205 = vrot.slane %v1197, %v1204
        %v1207 = vunpack.c.l.s4 1966171168
        %v1208 = vunpack.c.0.s8 %v1207
        %v1209 = vlaneseq
        %v1210 = vshrl.u32 %v1209, 7
        %v1211 = vsub.s32 %v1208, %v1210
        %v1212 = vrot.slane %v1198, %v1211
        %v1213 = vcombine.high %v1205, %v1205
        %v1214 = vcombine.high %v1212, %v1212
        %v1216 = vunpack.c.l.s4 1966171168
        %v1217 = vunpack.c.0.s8 %v1216
        %v1218 = vlaneseq
        %v1219 = vshrl.u32 %v1218, 7
        %v1220 = vsub.s32 %v1217, %v1219
        %v1221 = vrot.slane %v1205, %v1220
        %v1223 = vunpack.c.l.s4 1966171168
        %v1224 = vunpack.c.0.s8 %v1223
        %v1225 = vlaneseq
        %v1226 = vshrl.u32 %v1225, 7
        %v1227 = vsub.s32 %v1224, %v1226
        %v1228 = vrot.slane %v1212, %v1227
        %v1230 = vunpack.c.l.s4 1966171168
        %v1231 = vunpack.c.0.s8 %v1230
        %v1232 = vlaneseq
        %v1233 = vshrl.u32 %v1232, 7
        %v1234 = vsub.s32 %v1231, %v1233
        %v1235 = vrot.slane %v1213, %v1234
        %v1237 = vunpack.c.l.s4 1966171168
        %v1238 = vunpack.c.0.s8 %v1237
        %v1239 = vlaneseq
        %v1240 = vshrl.u32 %v1239, 7
        %v1241 = vsub.s32 %v1238, %v1240
        %v1242 = vrot.slane %v1214, %v1241
        %v1243 = vcombine.high %v1221, %v1221
        %v1244 = vcombine.high %v1228, %v1228
        %v1245 = vcombine.high %v1235, %v1235
        %v1246 = vcombine.high %v1242, %v1242
        %v1255 = vlaneseq
        %vm1256 = vcmp.ge.s32.totalorder %v1255, 0
        %vm1257 = vcmp.lt.s32.totalorder %v1255, 256
        %vm1258 = vmand %vm1256, %vm1257
        %1259 = vst.msk [vmem:[%s379] sm:$0x3] %vm1258, %v1221
        %1260 = vst.msk [vmem:[%s379 + $0x2] sm:$0x3] %vm1258, %v1235
        %1261 = vst.msk [vmem:[%s379 + $0x4] sm:$0x3] %vm1258, %v1243
        %1262 = vst.msk [vmem:[%s379 + $0x6] sm:$0x3] %vm1258, %v1245
        %1263 = vst.msk [vmem:[%s379 + $0x8] sm:$0x3] %vm1258, %v1228
        %1264 = vst.msk [vmem:[%s379 + $0xa] sm:$0x3] %vm1258, %v1242
        %1265 = vst.msk [vmem:[%s379 + $0xc] sm:$0x3] %vm1258, %v1244
        %1266 = vst.msk [vmem:[%s379 + $0xe] sm:$0x3] %vm1258, %v1246
        %s1267 = sand.u32 %s262, 1
        %s1268 = scalar_lea.sflag [#allocation4], %s1267
        %s1269 = sand.u32 %s262, 1
        %s1270 = smul.addr %s1269, 16
        %s1271 = scalar_lea.vmem [#allocation5], %s1270
        // Predicated region
        $region65: #{tpu_custom_call.1} parent=59 // pred_check
          %p1272 = pneg %p272
        $region66: #{tpu_custom_call.1} parent=59 // pred_check_branch
          %1274 = sbr.rel (%p1272) target = $region68
        $region67: #{tpu_custom_call.1} parent=59 // pred_region
          %s1276 = ssub.s32 256, 256
          %1277 = vsyncadd %s1268, %s1276
          %s1278 = smul.addr %s30, 2
          %s1279 = smul.addr %s29, 16
          %s1280 = sadd.s32 %s1278, %s1279
          %s1281 = smul.addr %s1280, 16
          %s1282 = scalar_lea.hbm %s10, %s1281
          %s1283 = sshll.u32 %s1271, 4
          %s1284 = int_to_ptr.vmem [resolvable:$true] %s1283
          %1289 = dma.vmem_to_hbm [thread:$0]  %s1284, 256, %s1282, %s1268, 32, 32, 2
        $region68: #{tpu_custom_call.1} parent=59 // pred_fallthru
          _
      $region60: #{tpu_custom_call.1} parent=5 // pred_fallthru
        _
      %p1290 = scmp.le.s32.totalorder 2, %s20
      // Predicated region
      $region69: #{tpu_custom_call.1} parent=5 // pred_check
        %p1291 = pneg %p1290
      $region70: #{tpu_custom_call.1} parent=5 // pred_check_branch
        %1293 = sbr.rel (%p1291) target = $region72
      $region71: #{tpu_custom_call.1} parent=5 // pred_region
        %s1294 = ssub.s32 %s20, 2
        // Predicated region
        $region73: #{tpu_custom_call.1} parent=71 // pred_check
          %p1295 = pneg %p278
        $region74: #{tpu_custom_call.1} parent=71 // pred_check_branch
          %1297 = sbr.rel (%p1295) target = $region76
        $region75: #{tpu_custom_call.1} parent=71 // pred_region
          %s1298 = sand.u32 %s263, 1
          %s1299 = scalar_lea.sflag [#allocation4], %s1298
          %s1300 = sand.u32 %s263, 1
          %s1301 = smul.addr %s1300, 16
          %s1302 = scalar_lea.vmem [#allocation5], %s1301
          %1303 = dma.done %s1299, 256
        $region76: #{tpu_custom_call.1} parent=71 // pred_fallthru
          _
      $region72: #{tpu_custom_call.1} parent=5 // pred_fallthru
        _
    $region6: #{tpu_custom_call.1} parent=1 // loop_footer
      %s24 = sadd.s32 1, %s20
    $region7: #{tpu_custom_call.1} parent=1 // loop_footer_branch
      %19 = sbr.rel target = $region3
    $region8: #{tpu_custom_call.1} parent=1 // loop_exit
      _
    %1304 = vsyncpa [#allocation3], 1
    %s1305 = scalar_lea.sflag [#allocation3], 1
    %1306 = vsyncpa %s1305, 1
    %1307 = vsyncpa [#allocation4], 1
    %s1308 = scalar_lea.sflag [#allocation4], 1
    %1309 = vsyncpa %s1308, 1

</llo_original>
